<compile_context>
chip_gen: v5e
topology: v5e:2x2
jax: 0.10.0
libtpu: 0.0.40
codegen_flags: <defaults>
</compile_context>

<pallas_src>
import jax
import jax.numpy as jnp
from jax.experimental import pallas as pl
from jax.experimental.pallas import tpu as pltpu

# ---------------- configuration (small, consistent with the module) ----------
BATCH = 8
X_DIM = 16                      # encoder_layer_sizes[0] (before conditional +=)
COND_DIM = 32                   # condition_size
LATENT = 8                      # latent_size
ENC_SIZES = [X_DIM, 64, 64]     # encoder_layer_sizes
DEC_SIZES = [64, 64, X_DIM]     # decoder_layer_sizes

H1, H2 = ENC_SIZES[1], ENC_SIZES[2]          # 64, 64
D0, D1, D2 = DEC_SIZES                       # 64, 64, 16
XC = X_DIM + COND_DIM                        # 48 = encoder L0 fan-in ([x|c])
ZC = LATENT + COND_DIM                       # 40 = decoder L0 fan-in ([z|c])
ACT_W = X_DIM + COND_DIM + LATENT            # 56 = [x|c|eps] slab width
OUT_W = 128                                  # lane-dense packed output width

# Packed weight-slab row offsets (all multiples of 8 -> sublane aligned views).
R_E0 = 0                    # (48, 64) encoder L0   (acts on [x|c])
R_E1 = R_E0 + XC            # 48:  (64, 64) encoder L1
R_HD = R_E1 + H1            # 112: (64, 16) fused [means|log_var] head (cols 0:16)
R_D0 = R_HD + H2            # 176: (40, 64) decoder L0 (acts on [z|c])
R_D1 = R_D0 + ZC            # 216: (64, 64) decoder L1
R_D2 = R_D1 + D0            # 280: (64, 16) decoder L2 (cols 0:16)
W_ROWS = R_D2 + D1          # 344 total rows


def _vae_kernel(act_ref, w_ref, b_ref, out_ref):
    act = act_ref[...]                       # (B, 56) = [x | c | eps]
    xc = act[:, :XC]                         # (B, 48) encoder L0 input (x and c adjacent)
    c = act[:, X_DIM:XC]                     # (B, 32)
    eps = act[:, XC:XC + LATENT]             # (B, 8)

    # ---- Encoder ----
    h = jnp.dot(xc, w_ref[R_E0:R_E1, :], preferred_element_type=jnp.float32) + b_ref[0:1, :]
    h = jnp.maximum(h, 0.0)                                           # A0 ReLU
    h = jnp.dot(h, w_ref[R_E1:R_HD, :], preferred_element_type=jnp.float32) + b_ref[1:2, :]
    h = jnp.maximum(h, 0.0)                                           # A1 ReLU

    # Fused means/log_var head: one (64,16) matmul, lane-split afterwards.
    heads = (jnp.dot(h, w_ref[R_HD:R_D0, :2 * LATENT],
                     preferred_element_type=jnp.float32)
             + b_ref[4:5, :2 * LATENT])
    means = heads[:, :LATENT]
    log_var = heads[:, LATENT:2 * LATENT]

    # ---- Reparameterization ----  (exp rides the EUP slot)
    std = jnp.exp(0.5 * log_var)
    z = eps * std + means

    # ---- Decoder ----
    zc = jnp.concatenate([z, c], axis=-1)                              # (B, 40)
    d = jnp.dot(zc, w_ref[R_D0:R_D1, :], preferred_element_type=jnp.float32) + b_ref[2:3, :]
    d = jnp.maximum(d, 0.0)                                            # ReLU
    d = jnp.dot(d, w_ref[R_D1:R_D2, :], preferred_element_type=jnp.float32) + b_ref[3:4, :]
    d = jnp.maximum(d, 0.0)                                            # ReLU
    recon = (jnp.dot(d, w_ref[R_D2:W_ROWS, :D2],
                     preferred_element_type=jnp.float32)
             + b_ref[5:6, :D2])
    # final decoder layer has no activation

    # Single lane-dense packed output: [recon(16)|means(8)|logvar(8)|z(8)|pad].
    pad = jnp.zeros((act.shape[0], OUT_W - (D2 + 3 * LATENT)), jnp.float32)
    out_ref[...] = jnp.concatenate([recon, means, log_var, z, pad], axis=-1)


def init_params(key):
    """Deterministic synthetic parameters matching the PyTorch module shapes
    (weights pre-transposed to (in, out) so y = x @ W + b)."""
    ks = iter(jax.random.split(key, 32))

    def lin(in_d, out_d):
        w = jax.random.normal(next(ks), (in_d, out_d), jnp.float32) * 0.1
        b = jax.random.normal(next(ks), (1, out_d), jnp.float32) * 0.1
        return w, b

    p = {}
    p["we0"], p["be0"] = lin(XC, H1)          # encoder L0 on concat(x, c)
    p["we1"], p["be1"] = lin(H1, H2)          # encoder L1
    p["wm"], p["bm"] = lin(H2, LATENT)        # linear_means
    p["wlv"], p["blv"] = lin(H2, LATENT)      # linear_log_var
    p["wd0"], p["bd0"] = lin(ZC, D0)          # decoder L0 on concat(z, c)
    p["wd1"], p["bd1"] = lin(D0, D1)          # decoder L1
    p["wd2"], p["bd2"] = lin(D1, D2)          # decoder L2 (no activation)
    return p


def pack_params(p):
    """Pack all layer weights into one (344, 64) slab and biases into (8, 64)."""
    def pad_cols(w, width=64):
        return jnp.pad(w, ((0, 0), (0, width - w.shape[1])))

    w_slab = jnp.concatenate([
        p["we0"],                                                  # rows   0:48
        p["we1"],                                                  # rows  48:112
        pad_cols(jnp.concatenate([p["wm"], p["wlv"]], axis=1)),    # rows 112:176 (cols 0:16)
        p["wd0"],                                                  # rows 176:216
        p["wd1"],                                                  # rows 216:280
        pad_cols(p["wd2"]),                                        # rows 280:344 (cols 0:16)
    ], axis=0)
    assert w_slab.shape == (W_ROWS, 64)

    b_slab = jnp.concatenate([
        p["be0"],                                                  # row 0
        p["be1"],                                                  # row 1
        p["bd0"],                                                  # row 2
        p["bd1"],                                                  # row 3
        pad_cols(jnp.concatenate([p["bm"], p["blv"]], axis=1)),    # row 4 (cols 0:16)
        pad_cols(p["bd2"]),                                        # row 5 (cols 0:16)
        jnp.zeros((2, 64), jnp.float32),                           # rows 6-7 pad to 8 sublanes
    ], axis=0)
    assert b_slab.shape == (8, 64)
    return w_slab, b_slab


def vae_forward(x, c, eps, w_slab, b_slab):
    # eps is passed in (rather than drawn with pltpu.prng_*) so the kernel is
    # bit-comparable against the pure-JAX reference below.
    act = jnp.concatenate([x, c, eps], axis=-1)                    # (B, 56)

    flops = 2 * BATCH * (XC * H1 + H1 * H2 + H2 * 2 * LATENT
                         + ZC * D0 + D0 * D1 + D1 * D2)
    bytes_accessed = 4 * (act.size + w_slab.size + b_slab.size + BATCH * OUT_W)

    vmem = pl.BlockSpec(memory_space=pltpu.MemorySpace.VMEM)
    out = pl.pallas_call(
        _vae_kernel,
        out_shape=jax.ShapeDtypeStruct((BATCH, OUT_W), jnp.float32),
        in_specs=[vmem, vmem, vmem],
        out_specs=vmem,
        cost_estimate=pl.CostEstimate(flops=flops,
                                      transcendentals=BATCH * LATENT,
                                      bytes_accessed=bytes_accessed),
    )(act, w_slab, b_slab)

    recon = out[:, :D2]
    means = out[:, D2:D2 + LATENT]
    log_var = out[:, D2 + LATENT:D2 + 2 * LATENT]
    z = out[:, D2 + 2 * LATENT:D2 + 3 * LATENT]
    return recon, means, log_var, z


def vae_reference(x, c, eps, p):
    """Pure-JAX reference (mirrors the PyTorch forward)."""
    xc = jnp.concatenate([x, c], axis=-1)
    h = jnp.maximum(xc @ p["we0"] + p["be0"], 0.0)
    h = jnp.maximum(h @ p["we1"] + p["be1"], 0.0)
    means = h @ p["wm"] + p["bm"]
    log_var = h @ p["wlv"] + p["blv"]
    std = jnp.exp(0.5 * log_var)
    z = eps * std + means
    zc = jnp.concatenate([z, c], axis=-1)
    d = jnp.maximum(zc @ p["wd0"] + p["bd0"], 0.0)
    d = jnp.maximum(d @ p["wd1"] + p["bd1"], 0.0)
    recon = d @ p["wd2"] + p["bd2"]
    return recon, means, log_var, z


if __name__ == "__main__":
    key = jax.random.PRNGKey(0)
    k_x, k_c, k_eps, k_p = jax.random.split(key, 4)

    x = jax.random.normal(k_x, (BATCH, X_DIM), jnp.float32)
    c = jax.random.normal(k_c, (BATCH, COND_DIM), jnp.float32)
    # torch.randn of the reparameterization trick -> deterministic JAX normal here
    eps = jax.random.normal(k_eps, (BATCH, LATENT), jnp.float32)
    params = init_params(k_p)
    w_slab, b_slab = pack_params(params)

    outs = vae_forward(x, c, eps, w_slab, b_slab)
    outs = jax.block_until_ready(outs)

    refs = vae_reference(x, c, eps, params)
    for o, r in zip(outs, refs):
        assert o.shape == r.shape and o.dtype == r.dtype
        assert jnp.allclose(o, r, atol=1e-4, rtol=1e-4), "mismatch vs JAX reference"

    print("KERNEL_OK")
</pallas_src>

<mosaic_0001>
module attributes {stable_mosaic.version = 11 : i64} {
  func.func @_vae_kernel(%arg0: memref<8x56xf32, #tpu.memory_space<vmem>>, %arg1: memref<344x64xf32, #tpu.memory_space<vmem>>, %arg2: memref<8x64xf32, #tpu.memory_space<vmem>>, %arg3: memref<8x128xf32, #tpu.memory_space<vmem>>) attributes {dimension_semantics = [], scalar_prefetch = 0 : i64, scratch_operands = 0 : i64, tpu.core_type = #tpu.core_type<tc>} {
    %c0 = arith.constant 0 : index
    %c0_0 = arith.constant 0 : index
    %0 = vector.load %arg0[%c0, %c0_0] : memref<8x56xf32, #tpu.memory_space<vmem>>, vector<8x56xf32>
    %1 = vector.extract_strided_slice %0 {offsets = [0, 0], sizes = [8, 48], strides = [1, 1]} : vector<8x56xf32> to vector<8x48xf32>
    %2 = vector.extract_strided_slice %0 {offsets = [0, 16], sizes = [8, 32], strides = [1, 1]} : vector<8x56xf32> to vector<8x32xf32>
    %3 = vector.extract_strided_slice %0 {offsets = [0, 48], sizes = [8, 8], strides = [1, 1]} : vector<8x56xf32> to vector<8x8xf32>
    %c0_1 = arith.constant 0 : index
    %c0_2 = arith.constant 0 : index
    %4 = vector.load %arg1[%c0_1, %c0_2] : memref<344x64xf32, #tpu.memory_space<vmem>>, vector<48x64xf32>
    %cst = arith.constant dense<0.000000e+00> : vector<8x64xf32>
    %5 = tpu.matmul %1, %4, %cst {dimension_numbers = #tpu.dot_dimension_numbers<[1], [0], [0], [1], [0, 0, 1, 1], [], []>} : vector<8x48xf32>, vector<48x64xf32>, vector<8x64xf32> -> vector<8x64xf32>
    %c0_3 = arith.constant 0 : index
    %c0_4 = arith.constant 0 : index
    %6 = vector.load %arg2[%c0_3, %c0_4] : memref<8x64xf32, #tpu.memory_space<vmem>>, vector<1x64xf32>
    %7 = vector.broadcast %6 : vector<1x64xf32> to vector<8x64xf32>
    %8 = arith.addf %5, %7 : vector<8x64xf32>
    %cst_5 = arith.constant 0.000000e+00 : f32
    %9 = vector.broadcast %cst_5 : f32 to vector<8x64xf32>
    %10 = arith.maximumf %8, %9 : vector<8x64xf32>
    %c48 = arith.constant 48 : index
    %c0_6 = arith.constant 0 : index
    %11 = vector.load %arg1[%c48, %c0_6] : memref<344x64xf32, #tpu.memory_space<vmem>>, vector<64x64xf32>
    %cst_7 = arith.constant dense<0.000000e+00> : vector<8x64xf32>
    %12 = tpu.matmul %10, %11, %cst_7 {dimension_numbers = #tpu.dot_dimension_numbers<[1], [0], [0], [1], [0, 0, 1, 1], [], []>} : vector<8x64xf32>, vector<64x64xf32>, vector<8x64xf32> -> vector<8x64xf32>
    %c1 = arith.constant 1 : index
    %c0_8 = arith.constant 0 : index
    %13 = vector.load %arg2[%c1, %c0_8] : memref<8x64xf32, #tpu.memory_space<vmem>>, vector<1x64xf32>
    %14 = vector.broadcast %13 : vector<1x64xf32> to vector<8x64xf32>
    %15 = arith.addf %12, %14 : vector<8x64xf32>
    %cst_9 = arith.constant 0.000000e+00 : f32
    %16 = vector.broadcast %cst_9 : f32 to vector<8x64xf32>
    %17 = arith.maximumf %15, %16 : vector<8x64xf32>
    %c112 = arith.constant 112 : index
    %c0_10 = arith.constant 0 : index
    %18 = vector.load %arg1[%c112, %c0_10] : memref<344x64xf32, #tpu.memory_space<vmem>>, vector<64x16xf32>
    %cst_11 = arith.constant dense<0.000000e+00> : vector<8x16xf32>
    %19 = tpu.matmul %17, %18, %cst_11 {dimension_numbers = #tpu.dot_dimension_numbers<[1], [0], [0], [1], [0, 0, 1, 1], [], []>} : vector<8x64xf32>, vector<64x16xf32>, vector<8x16xf32> -> vector<8x16xf32>
    %c4 = arith.constant 4 : index
    %c0_12 = arith.constant 0 : index
    %20 = vector.load %arg2[%c4, %c0_12] : memref<8x64xf32, #tpu.memory_space<vmem>>, vector<1x16xf32>
    %21 = vector.broadcast %20 : vector<1x16xf32> to vector<8x16xf32>
    %22 = arith.addf %19, %21 : vector<8x16xf32>
    %23 = vector.extract_strided_slice %22 {offsets = [0, 0], sizes = [8, 8], strides = [1, 1]} : vector<8x16xf32> to vector<8x8xf32>
    %24 = vector.extract_strided_slice %22 {offsets = [0, 8], sizes = [8, 8], strides = [1, 1]} : vector<8x16xf32> to vector<8x8xf32>
    %cst_13 = arith.constant 5.000000e-01 : f32
    %25 = vector.broadcast %cst_13 : f32 to vector<8x8xf32>
    %26 = arith.mulf %25, %24 : vector<8x8xf32>
    %27 = math.exp %26 : vector<8x8xf32>
    %28 = arith.mulf %3, %27 : vector<8x8xf32>
    %29 = arith.addf %28, %23 : vector<8x8xf32>
    %30 = tpu.concatenate %29, %2 in 1 : vector<8x8xf32>, vector<8x32xf32> -> vector<8x40xf32>
    %c176 = arith.constant 176 : index
    %c0_14 = arith.constant 0 : index
    %31 = vector.load %arg1[%c176, %c0_14] : memref<344x64xf32, #tpu.memory_space<vmem>>, vector<40x64xf32>
    %cst_15 = arith.constant dense<0.000000e+00> : vector<8x64xf32>
    %32 = tpu.matmul %30, %31, %cst_15 {dimension_numbers = #tpu.dot_dimension_numbers<[1], [0], [0], [1], [0, 0, 1, 1], [], []>} : vector<8x40xf32>, vector<40x64xf32>, vector<8x64xf32> -> vector<8x64xf32>
    %c2 = arith.constant 2 : index
    %c0_16 = arith.constant 0 : index
    %33 = vector.load %arg2[%c2, %c0_16] : memref<8x64xf32, #tpu.memory_space<vmem>>, vector<1x64xf32>
    %34 = vector.broadcast %33 : vector<1x64xf32> to vector<8x64xf32>
    %35 = arith.addf %32, %34 : vector<8x64xf32>
    %cst_17 = arith.constant 0.000000e+00 : f32
    %36 = vector.broadcast %cst_17 : f32 to vector<8x64xf32>
    %37 = arith.maximumf %35, %36 : vector<8x64xf32>
    %c216 = arith.constant 216 : index
    %c0_18 = arith.constant 0 : index
    %38 = vector.load %arg1[%c216, %c0_18] : memref<344x64xf32, #tpu.memory_space<vmem>>, vector<64x64xf32>
    %cst_19 = arith.constant dense<0.000000e+00> : vector<8x64xf32>
    %39 = tpu.matmul %37, %38, %cst_19 {dimension_numbers = #tpu.dot_dimension_numbers<[1], [0], [0], [1], [0, 0, 1, 1], [], []>} : vector<8x64xf32>, vector<64x64xf32>, vector<8x64xf32> -> vector<8x64xf32>
    %c3 = arith.constant 3 : index
    %c0_20 = arith.constant 0 : index
    %40 = vector.load %arg2[%c3, %c0_20] : memref<8x64xf32, #tpu.memory_space<vmem>>, vector<1x64xf32>
    %41 = vector.broadcast %40 : vector<1x64xf32> to vector<8x64xf32>
    %42 = arith.addf %39, %41 : vector<8x64xf32>
    %cst_21 = arith.constant 0.000000e+00 : f32
    %43 = vector.broadcast %cst_21 : f32 to vector<8x64xf32>
    %44 = arith.maximumf %42, %43 : vector<8x64xf32>
    %c280 = arith.constant 280 : index
    %c0_22 = arith.constant 0 : index
    %45 = vector.load %arg1[%c280, %c0_22] : memref<344x64xf32, #tpu.memory_space<vmem>>, vector<64x16xf32>
    %cst_23 = arith.constant dense<0.000000e+00> : vector<8x16xf32>
    %46 = tpu.matmul %44, %45, %cst_23 {dimension_numbers = #tpu.dot_dimension_numbers<[1], [0], [0], [1], [0, 0, 1, 1], [], []>} : vector<8x64xf32>, vector<64x16xf32>, vector<8x16xf32> -> vector<8x16xf32>
    %c5 = arith.constant 5 : index
    %c0_24 = arith.constant 0 : index
    %47 = vector.load %arg2[%c5, %c0_24] : memref<8x64xf32, #tpu.memory_space<vmem>>, vector<1x16xf32>
    %48 = vector.broadcast %47 : vector<1x16xf32> to vector<8x16xf32>
    %49 = arith.addf %46, %48 : vector<8x16xf32>
    %cst_25 = arith.constant 0.000000e+00 : f32
    %50 = vector.broadcast %cst_25 : f32 to vector<8x88xf32>
    %51 = tpu.concatenate %49, %23, %24, %29, %50 in 1 : vector<8x16xf32>, vector<8x8xf32>, vector<8x8xf32>, vector<8x8xf32>, vector<8x88xf32> -> vector<8x128xf32>
    %c0_26 = arith.constant 0 : index
    %c0_27 = arith.constant 0 : index
    %52 = vector.load %arg3[%c0_26, %c0_27] : memref<8x128xf32, #tpu.memory_space<vmem>>, vector<8x128xf32>
    tpu.vector_store %arg3[%c0_26, %c0_27], %51 {strides = array<i32>} : memref<8x128xf32, #tpu.memory_space<vmem>>, vector<8x128xf32>,
    return
  }
}

</mosaic_0001>

<llo_original>
// kernel: tpu_custom_call.1
$region0: #{tpu_custom_call.1}
  #allocation0 [shape = 'u32[]', space=smem, size = 0x4, offset = 0x4, fixed_abs, tag = 'smem constant byte address 0x4 - core index']
  #allocation1 [shape = 'u32[72,128]{1,0:T(1,128)}', space=vmem, size = 0x9000, scoped, tag = 'internal scratch']
  %s0 = inlined_call_operand.vmem [shape: f32[8,56], index: 0, kind: input, shape index: {}]
  %s1 = inlined_call_operand.vmem [shape: f32[344,64], index: 1, kind: input, shape index: {}]
  %s2 = inlined_call_operand.vmem [shape: f32[8,64], index: 2, kind: input, shape index: {}]
  %s3 = inlined_call_operand.hbm [shape: f32[8,128], index: 3, kind: output, shape index: {}]
  %s4 = sld [smem:[#allocation0]]
  $region22: #{tpu_custom_call.1} parent=0
    _
  %s6 = ssub.s32 1, %s4
  %s7 = scalar_select 0, %s6, %s4
  $region1: #{tpu_custom_call.1} parent=0
    #allocation2 [shape = 'u8[4096]{0}', space=vmem, size = 0x1000, scoped, tag = 'output window, operand 0, single buffered']
    #allocation3 [shape = 's32[1]{0}', space=sflag, size = 0x4, scoped, tag = 'scoped memory for tpu_custom_call.1']
    %8 = vsyncpa [#allocation3], 0
    // Predicated region
    $region2: #{tpu_custom_call.1} parent=1 // pred_check
      _
    $region3: #{tpu_custom_call.1} parent=1 // pred_check_branch
      %10 = sbr.rel (0) target = $region5
    $region4: #{tpu_custom_call.1} parent=1 // pred_region
      _
    $region5: #{tpu_custom_call.1} parent=1 // pred_fallthru
      _
    // Predicated region
    $region6: #{tpu_custom_call.1} parent=1 // pred_check
      _
    $region7: #{tpu_custom_call.1} parent=1 // pred_check_branch
      %12 = sbr.rel (0) target = $region9
    $region8: #{tpu_custom_call.1} parent=1 // pred_region
      _
    $region9: #{tpu_custom_call.1} parent=1 // pred_fallthru
      _
    // Predicated region
    $region10: #{tpu_custom_call.1} parent=1 // pred_check
      _
    $region11: #{tpu_custom_call.1} parent=1 // pred_check_branch
      %14 = sbr.rel (0) target = $region13
    $region12: #{tpu_custom_call.1} parent=1 // pred_region
      _
    $region13: #{tpu_custom_call.1} parent=1 // pred_fallthru
      _
    %v15 = vld [vmem:[%s0] sm:$0xff]
    %v16 = vld [vmem:[%s1] sm:$0xff]
    %v17 = vld [vmem:[%s1 + $0x8] sm:$0xff]
    %v18 = vld [vmem:[%s1 + $0x10] sm:$0xff]
    %v19 = vld [vmem:[%s1 + $0x18] sm:$0xff]
    %v20 = vld [vmem:[%s1 + $0x20] sm:$0xff]
    %v21 = vld [vmem:[%s1 + $0x28] sm:$0xff]
    %v22 = vld [vmem:[%s2] sm:$0x1]
    %v23 = vperm.slane %v22, 0
    %vm24 = vcmask 392192
    %v26 = vsel %vm24, %v15, 0
    %28 = vmatpush.msra.mxu0 0.0
    %29 = vmatpush.msra.mxu0 0.0
    %30 = vmatpush.msra.mxu0 0.0
    %31 = vmatpush.msra.mxu0 0.0
    %32 = vmatpush.msra.mxu0 0.0
    %33 = vmatpush.msra.mxu0 0.0
    %34 = vmatpush.msra.mxu0 0.0
    %35 = vmatpush.msra.mxu0 0.0
    %36 = vmatpush.msra.mxu0 0.0
    %37 = vmatpush.msra.mxu0 0.0
    %38 = vmatpush.msra.mxu0 %v21
    %39 = vmatpush.msra.mxu0 %v20
    %40 = vmatpush.msra.mxu0 %v19
    %41 = vmatpush.msra.mxu0 %v18
    %42 = vmatpush.msra.mxu0 %v17
    %43 = vmatpush.msra.mxu0 %v16
    %44 = vmatmul.f32.gmra.mxu0 %v26
    %v45 = vpop.f32.mrf.mxu0
    %v46 = vadd.f32 %v23, %v45
    %47 = vdwg.mxu0
    %v48 = vmax.f32 %v46, 0.0
    %v49 = vld [vmem:[%s1 + $0x30] sm:$0xff]
    %v50 = vld [vmem:[%s1 + $0x38] sm:$0xff]
    %v51 = vld [vmem:[%s1 + $0x40] sm:$0xff]
    %v52 = vld [vmem:[%s1 + $0x48] sm:$0xff]
    %v53 = vld [vmem:[%s1 + $0x50] sm:$0xff]
    %v54 = vld [vmem:[%s1 + $0x58] sm:$0xff]
    %v55 = vld [vmem:[%s1 + $0x60] sm:$0xff]
    %v56 = vld [vmem:[%s1 + $0x68] sm:$0xff]
    %v57 = vld [vmem:[%s2 + $0x1] sm:$0x1]
    %v58 = vperm.slane %v57, 0
    %vm59 = vcmask 523264
    %v61 = vsel %vm59, %v48, 0
    %63 = vmatpush.msra.mxu0 0.0
    %64 = vmatpush.msra.mxu0 0.0
    %65 = vmatpush.msra.mxu0 0.0
    %66 = vmatpush.msra.mxu0 0.0
    %67 = vmatpush.msra.mxu0 0.0
    %68 = vmatpush.msra.mxu0 0.0
    %69 = vmatpush.msra.mxu0 0.0
    %70 = vmatpush.msra.mxu0 0.0
    %71 = vmatpush.msra.mxu0 %v56
    %72 = vmatpush.msra.mxu0 %v55
    %73 = vmatpush.msra.mxu0 %v54
    %74 = vmatpush.msra.mxu0 %v53
    %75 = vmatpush.msra.mxu0 %v52
    %76 = vmatpush.msra.mxu0 %v51
    %77 = vmatpush.msra.mxu0 %v50
    %78 = vmatpush.msra.mxu0 %v49
    %79 = vmatmul.f32.gmra.mxu0 %v61
    %v80 = vpop.f32.mrf.mxu0
    %v81 = vadd.f32 %v58, %v80
    %82 = vdwg.mxu0
    %v83 = vmax.f32 %v81, 0.0
    %v84 = vld [vmem:[%s1 + $0x70] sm:$0xff]
    %v85 = vld [vmem:[%s1 + $0x78] sm:$0xff]
    %v86 = vld [vmem:[%s1 + $0x80] sm:$0xff]
    %v87 = vld [vmem:[%s1 + $0x88] sm:$0xff]
    %v88 = vld [vmem:[%s1 + $0x90] sm:$0xff]
    %v89 = vld [vmem:[%s1 + $0x98] sm:$0xff]
    %v90 = vld [vmem:[%s1 + $0xa0] sm:$0xff]
    %v91 = vld [vmem:[%s1 + $0xa8] sm:$0xff]
    %v92 = vld [vmem:[%s2 + $0x4] sm:$0x1]
    %v93 = vperm.slane %v92, 0
    %v95 = vsel %vm59, %v83, 0
    %97 = vmatpush.msra.mxu0 0.0
    %98 = vmatpush.msra.mxu0 0.0
    %99 = vmatpush.msra.mxu0 0.0
    %100 = vmatpush.msra.mxu0 0.0
    %101 = vmatpush.msra.mxu0 0.0
    %102 = vmatpush.msra.mxu0 0.0
    %103 = vmatpush.msra.mxu0 0.0
    %104 = vmatpush.msra.mxu0 0.0
    %105 = vmatpush.msra.mxu0 %v91
    %106 = vmatpush.msra.mxu0 %v90
    %107 = vmatpush.msra.mxu0 %v89
    %108 = vmatpush.msra.mxu0 %v88
    %109 = vmatpush.msra.mxu0 %v87
    %110 = vmatpush.msra.mxu0 %v86
    %111 = vmatpush.msra.mxu0 %v85
    %112 = vmatpush.msra.mxu0 %v84
    %113 = vmatmul.f32.gmra.mxu0 %v95
    %v114 = vpop.f32.mrf.mxu0
    %v115 = vadd.f32 %v93, %v114
    %116 = vdwg.mxu0
    %v117 = vmul.f32 %v115, 0.5
    %v118 = vmul.f32 %v117, 1.442695
    %v119 = vpow.pop %v118
    %121 = vrot.lane.b32.xlu0 %v119, 40
    %v122 = vpop.permute.xlu0 %121
    %v124 = vmul.f32 %v15, %v122
    %126 = vrot.lane.b32.xlu0 %v115, 48
    %v127 = vpop.permute.xlu0 %126
    %v129 = vadd.f32 %v124, %v127
    %131 = vrot.lane.b32.xlu0 %v129, 80
    %v132 = vpop.permute.xlu0 %131
    %134 = vrot.lane.b32.xlu0 %v15, 120
    %v135 = vpop.permute.xlu0 %134
    %vm137 = vcmask 64512
    %v138 = vsel %vm137, %v132, %v135
    %v139 = vld [vmem:[%s1 + $0xb0] sm:$0xff]
    %v140 = vld [vmem:[%s1 + $0xb8] sm:$0xff]
    %v141 = vld [vmem:[%s1 + $0xc0] sm:$0xff]
    %v142 = vld [vmem:[%s1 + $0xc8] sm:$0xff]
    %v143 = vld [vmem:[%s1 + $0xd0] sm:$0xff]
    %v144 = vld [vmem:[%s2 + $0x2] sm:$0x1]
    %v145 = vperm.slane %v144, 0
    %vm146 = vcmask 326656
    %v148 = vsel %vm146, %v138, 0
    %150 = vmatpush.msra.mxu0 0.0
    %151 = vmatpush.msra.mxu0 0.0
    %152 = vmatpush.msra.mxu0 0.0
    %153 = vmatpush.msra.mxu0 0.0
    %154 = vmatpush.msra.mxu0 0.0
    %155 = vmatpush.msra.mxu0 0.0
    %156 = vmatpush.msra.mxu0 0.0
    %157 = vmatpush.msra.mxu0 0.0
    %158 = vmatpush.msra.mxu0 0.0
    %159 = vmatpush.msra.mxu0 0.0
    %160 = vmatpush.msra.mxu0 0.0
    %161 = vmatpush.msra.mxu0 %v143
    %162 = vmatpush.msra.mxu0 %v142
    %163 = vmatpush.msra.mxu0 %v141
    %164 = vmatpush.msra.mxu0 %v140
    %165 = vmatpush.msra.mxu0 %v139
    %166 = vmatmul.f32.gmra.mxu0 %v148
    %v167 = vpop.f32.mrf.mxu0
    %v168 = vadd.f32 %v145, %v167
    %169 = vdwg.mxu0
    %v170 = vmax.f32 %v168, 0.0
    %v171 = vld [vmem:[%s1 + $0xd8] sm:$0xff]
    %v172 = vld [vmem:[%s1 + $0xe0] sm:$0xff]
    %v173 = vld [vmem:[%s1 + $0xe8] sm:$0xff]
    %v174 = vld [vmem:[%s1 + $0xf0] sm:$0xff]
    %v175 = vld [vmem:[%s1 + $0xf8] sm:$0xff]
    %v176 = vld [vmem:[%s1 + $0x100] sm:$0xff]
    %v177 = vld [vmem:[%s1 + $0x108] sm:$0xff]
    %v178 = vld [vmem:[%s1 + $0x110] sm:$0xff]
    %v179 = vld [vmem:[%s2 + $0x3] sm:$0x1]
    %v180 = vperm.slane %v179, 0
    %v182 = vsel %vm59, %v170, 0
    %184 = vmatpush.msra.mxu0 0.0
    %185 = vmatpush.msra.mxu0 0.0
    %186 = vmatpush.msra.mxu0 0.0
    %187 = vmatpush.msra.mxu0 0.0
    %188 = vmatpush.msra.mxu0 0.0
    %189 = vmatpush.msra.mxu0 0.0
    %190 = vmatpush.msra.mxu0 0.0
    %191 = vmatpush.msra.mxu0 0.0
    %192 = vmatpush.msra.mxu0 %v178
    %193 = vmatpush.msra.mxu0 %v177
    %194 = vmatpush.msra.mxu0 %v176
    %195 = vmatpush.msra.mxu0 %v175
    %196 = vmatpush.msra.mxu0 %v174
    %197 = vmatpush.msra.mxu0 %v173
    %198 = vmatpush.msra.mxu0 %v172
    %199 = vmatpush.msra.mxu0 %v171
    %200 = vmatmul.f32.gmra.mxu0 %v182
    %v201 = vpop.f32.mrf.mxu0
    %v202 = vadd.f32 %v180, %v201
    %203 = vdwg.mxu0
    %v204 = vmax.f32 %v202, 0.0
    %v205 = vld [vmem:[%s1 + $0x118] sm:$0xff]
    %v206 = vld [vmem:[%s1 + $0x120] sm:$0xff]
    %v207 = vld [vmem:[%s1 + $0x128] sm:$0xff]
    %v208 = vld [vmem:[%s1 + $0x130] sm:$0xff]
    %v209 = vld [vmem:[%s1 + $0x138] sm:$0xff]
    %v210 = vld [vmem:[%s1 + $0x140] sm:$0xff]
    %v211 = vld [vmem:[%s1 + $0x148] sm:$0xff]
    %v212 = vld [vmem:[%s1 + $0x150] sm:$0xff]
    %v213 = vld [vmem:[%s2 + $0x5] sm:$0x1]
    %v214 = vperm.slane %v213, 0
    %v216 = vsel %vm59, %v204, 0
    %218 = vmatpush.msra.mxu0 0.0
    %219 = vmatpush.msra.mxu0 0.0
    %220 = vmatpush.msra.mxu0 0.0
    %221 = vmatpush.msra.mxu0 0.0
    %222 = vmatpush.msra.mxu0 0.0
    %223 = vmatpush.msra.mxu0 0.0
    %224 = vmatpush.msra.mxu0 0.0
    %225 = vmatpush.msra.mxu0 0.0
    %226 = vmatpush.msra.mxu0 %v212
    %227 = vmatpush.msra.mxu0 %v211
    %228 = vmatpush.msra.mxu0 %v210
    %229 = vmatpush.msra.mxu0 %v209
    %230 = vmatpush.msra.mxu0 %v208
    %231 = vmatpush.msra.mxu0 %v207
    %232 = vmatpush.msra.mxu0 %v206
    %233 = vmatpush.msra.mxu0 %v205
    %234 = vmatmul.f32.gmra.mxu0 %v216
    %v235 = vpop.f32.mrf.mxu0
    %v236 = vadd.f32 %v214, %v235
    %237 = vdwg.mxu0
    %238 = vrot.lane.b32.xlu0 %v115, 16
    %v239 = vpop.permute.xlu0 %238
    %241 = vrot.lane.b32.xlu0 %v129, 112
    %v242 = vpop.permute.xlu0 %241
    %vm244 = vcmask 130048
    %v245 = vsel %vm244, %v236, %v239
    %vm246 = vcmask 195584
    %v247 = vsel %vm246, %v245, %v239
    %vm248 = vcmask 261120
    %v249 = vsel %vm248, %v247, %v242
    %v250 = vsel %vm146, %v249, 0.0
    %251 = vst [vmem:[#allocation2] sm:$0xff] %v250
    // Predicated region
    $region14: #{tpu_custom_call.1} parent=1 // pred_check
      _
    $region15: #{tpu_custom_call.1} parent=1 // pred_check_branch
      %253 = sbr.rel (0) target = $region17
    $region16: #{tpu_custom_call.1} parent=1 // pred_region
      %255 = vsyncadd [#allocation3], 0
      %s257 = sshll.u32 [#allocation2], 4
      %s258 = int_to_ptr.vmem [resolvable:$true] %s257
      %s259 = sshll.u32 %s3, 4
      %s260 = int_to_ptr.hbm [resolvable:$true] %s259
      %262 = dma.vmem_to_hbm [thread:$0]  %s258, 128, %s260, [#allocation3]
    $region17: #{tpu_custom_call.1} parent=1 // pred_fallthru
      _
    // Predicated region
    $region18: #{tpu_custom_call.1} parent=1 // pred_check
      _
    $region19: #{tpu_custom_call.1} parent=1 // pred_check_branch
      %264 = sbr.rel (0) target = $region21
    $region20: #{tpu_custom_call.1} parent=1 // pred_region
      %266 = dma.done [#allocation3], 128
    $region21: #{tpu_custom_call.1} parent=1 // pred_fallthru
      _
    %267 = vsyncpa [#allocation3], 1

</llo_original>
